<compile_context>
chip_gen: v7x
topology: tpu7x:2x2x1
jax: 0.10.0
libtpu: 0.0.40
codegen_flags: <defaults>
</compile_context>

<pallas_src>
import math
import functools

import jax
import jax.numpy as jnp
from jax.experimental import pallas as pl
from jax.experimental.pallas import tpu as pltpu


# ---------------------------------------------------------------------------
# shared per-timestep math (used by both kernels)
# ---------------------------------------------------------------------------
def _cell_step(x, h, c, wx_ref, wh_ref, b_ref, mog_refs, mogrify_steps, hidden_size):
    """One mogrifier + LSTM update.  x/h/c are f32; weights read from refs."""
    H = hidden_size

    # --- mogrifier ping-pong (static unroll) ---
    for i in range(mogrify_steps):
        w_ref = mog_refs[2 * i]
        mb = mog_refs[2 * i + 1][...].astype(jnp.float32)
        if (i + 1) % 2 == 0:
            # h = 2 * sigmoid(Linear_{I->H}(x)) * h
            z = jnp.dot(x.astype(w_ref.dtype), w_ref[...],
                        preferred_element_type=jnp.float32) + mb
            h = 2.0 * jax.nn.sigmoid(z) * h
        else:
            # x = 2 * sigmoid(Linear_{H->I}(h)) * x
            z = jnp.dot(h.astype(w_ref.dtype), w_ref[...],
                        preferred_element_type=jnp.float32) + mb
            x = 2.0 * jax.nn.sigmoid(z) * x

    # --- gates: two accumulating MXU matmuls, no per-step concat ---
    gates = (jnp.dot(x.astype(wx_ref.dtype), wx_ref[...],
                     preferred_element_type=jnp.float32)
             + jnp.dot(h.astype(wh_ref.dtype), wh_ref[...],
                       preferred_element_type=jnp.float32)
             + b_ref[...].astype(jnp.float32))

    # columns permuted host-side to [in, forget, out | candidate]:
    # one contiguous sigmoid over 3H, one tanh over H.
    sig = jax.nn.sigmoid(gates[:, :3 * H])
    in_gate = sig[:, 0 * H:1 * H]
    forget_gate = sig[:, 1 * H:2 * H]
    out_gate = sig[:, 2 * H:3 * H]
    new_memory = jnp.tanh(gates[:, 3 * H:])

    c_new = forget_gate * c + in_gate * new_memory
    h_new = out_gate * jnp.tanh(c_new)
    return h_new, c_new


# ---------------------------------------------------------------------------
# single-step cell kernel (MogrifierLSTMCell.forward, packed-state API)
# ---------------------------------------------------------------------------
def _make_cell_kernel(mogrify_steps: int, hidden_size: int):
    def kernel(*refs):
        # inputs : hc (B,2H), x (B,I), wx (I,4H), wh (H,4H), b (1,4H), (mog_w,mog_b)*
        # output : hc_new (B,2H), aliased onto hc's HBM buffer
        hc_ref, x_ref, wx_ref, wh_ref, b_ref = refs[:5]
        mog_refs = refs[5:5 + 2 * mogrify_steps]
        hc_out = refs[5 + 2 * mogrify_steps]

        H = hidden_size
        hc = hc_ref[...].astype(jnp.float32)
        h = hc[:, :H]
        c = hc[:, H:]
        x = x_ref[...].astype(jnp.float32)

        h_new, c_new = _cell_step(x, h, c, wx_ref, wh_ref, b_ref,
                                  mog_refs, mogrify_steps, H)
        hc_out[...] = jnp.concatenate([h_new, c_new], axis=1).astype(hc_out.dtype)

    return kernel


def mogrifier_lstm_cell(x, hc, params, *, mogrify_steps: int):
    """One cell step on packed state hc = concat([h, c], 1) -> new packed state."""
    batch, two_h = hc.shape
    hidden_size = two_h // 2

    inputs = [hc, x, params["wx"], params["wh"], params["b"]]
    for i in range(mogrify_steps):
        inputs += [params["mog_w"][i], params["mog_b"][i]]

    vmem = pl.BlockSpec(memory_space=pltpu.MemorySpace.VMEM)
    return pl.pallas_call(
        _make_cell_kernel(mogrify_steps, hidden_size),
        out_shape=jax.ShapeDtypeStruct((batch, two_h), hc.dtype),  # hc.dtype: valid alias
        in_specs=[vmem] * len(inputs),
        out_specs=vmem,
        input_output_aliases={0: 0},  # reuse the packed-state HBM buffer
    )(*inputs)


# ---------------------------------------------------------------------------
# time-fused sequence kernel, gridded over (batch_tiles, T)
# ---------------------------------------------------------------------------
def _make_seq_kernel(mogrify_steps: int, hidden_size: int):
    H = hidden_size

    def kernel(*refs):
        # inputs : xs (1,tb,I), hc0 (tb,2H), wx, wh, b, (mog_w,mog_b)*steps
        # outputs: hs (1,tb,H), hc_final (tb,2H) (aliased onto hc0)
        # scratch: h_sc (tb,H) f32, c_sc (tb,H) f32  -- recurrent carry
        n_in = 5 + 2 * mogrify_steps
        xs_ref, hc0_ref, wx_ref, wh_ref, b_ref = refs[:5]
        mog_refs = refs[5:n_in]
        hs_ref, hc_out_ref = refs[n_in:n_in + 2]
        h_sc, c_sc = refs[n_in + 2:]

        t = pl.program_id(1)

        @pl.when(t == 0)
        def _():
            hc0 = hc0_ref[...].astype(jnp.float32)
            h_sc[...] = hc0[:, :H]
            c_sc[...] = hc0[:, H:]

        x = xs_ref[0].astype(jnp.float32)
        h_new, c_new = _cell_step(x, h_sc[...], c_sc[...], wx_ref, wh_ref, b_ref,
                                  mog_refs, mogrify_steps, H)

        h_sc[...] = h_new
        c_sc[...] = c_new
        hs_ref[0] = h_new.astype(hs_ref.dtype)

        @pl.when(t == pl.num_programs(1) - 1)
        def _():
            hc_out_ref[...] = jnp.concatenate([h_new, c_new], axis=1).astype(hc_out_ref.dtype)

    return kernel


def mogrifier_lstm_sequence(xs, hc0, params, *, mogrify_steps: int, batch_tile=None):
    """Run a (T, batch, input) sequence through the cell in one gridded kernel.

    For peak MXU utilization stack independent sequences so batch (or
    batch_tile) is >= 128 and mark the batch axis 'parallel' (done below).
    """
    T, batch, input_size = xs.shape
    two_h = hc0.shape[1]
    hidden_size = two_h // 2
    tb = batch if batch_tile is None else batch_tile
    assert batch % tb == 0
    nb = batch // tb

    inputs = [xs, hc0, params["wx"], params["wh"], params["b"]]
    for i in range(mogrify_steps):
        inputs += [params["mog_w"][i], params["mog_b"][i]]

    const2 = lambda b, t: (0, 0)  # weights: constant block -> VMEM-resident, no re-DMA
    in_specs = [
        pl.BlockSpec((1, tb, input_size), lambda b, t: (t, b, 0)),   # xs: one step per t
        pl.BlockSpec((tb, two_h), lambda b, t: (b, 0)),              # hc0 per batch tile
        pl.BlockSpec(params["wx"].shape, const2),
        pl.BlockSpec(params["wh"].shape, const2),
        pl.BlockSpec(params["b"].shape, const2),
    ]
    for i in range(mogrify_steps):
        in_specs.append(pl.BlockSpec(params["mog_w"][i].shape, const2))
        in_specs.append(pl.BlockSpec(params["mog_b"][i].shape, const2))

    out_specs = (
        pl.BlockSpec((1, tb, hidden_size), lambda b, t: (t, b, 0)),  # hs, per-step store
        pl.BlockSpec((tb, two_h), lambda b, t: (b, 0)),              # final packed state
    )
    out_shape = (
        jax.ShapeDtypeStruct((T, batch, hidden_size), xs.dtype),
        jax.ShapeDtypeStruct((batch, two_h), hc0.dtype),
    )
    scratch = [pltpu.VMEM((tb, hidden_size), jnp.float32),
               pltpu.VMEM((tb, hidden_size), jnp.float32)]

    hs, hc_fin = pl.pallas_call(
        _make_seq_kernel(mogrify_steps, hidden_size),
        out_shape=out_shape,
        grid_spec=pltpu.PrefetchScalarGridSpec(
            num_scalar_prefetch=0,
            grid=(nb, T),
            in_specs=in_specs,
            out_specs=out_specs,
            scratch_shapes=scratch),
        compiler_params=pltpu.CompilerParams(
            dimension_semantics=("parallel", "arbitrary")),
        input_output_aliases={1: 1},  # hc0 buffer reused for the final state
    )(*inputs)
    return hs, hc_fin


# ---------------------------------------------------------------------------
# params / pure-JAX reference
# ---------------------------------------------------------------------------
def init_params(key, input_size, hidden_size, mogrify_steps, dtype=jnp.float32):
    """Matches the PyTorch module's uniform(-std, std) init.

    Kernel-facing weights: x2h / h2h kept as separate (in, 4H) matrices
    (so the kernel avoids a per-step concat) with gate columns permuted to
    [in, forget, out | candidate]; bias fused (x2h_b + h2h_b).  Original
    PyTorch-order tensors are also kept for the reference implementation.
    """
    std = 1.0 / math.sqrt(hidden_size)
    H = hidden_size

    def uni(k, shape):
        return jax.random.uniform(k, shape, dtype=jnp.float32,
                                  minval=-std, maxval=std).astype(dtype)

    keys = jax.random.split(key, 4 + 2 * max(mogrify_steps, 1))
    x2h_w = uni(keys[0], (input_size, 4 * H))   # PyTorch weight.T, cols [i, f, g, o]
    x2h_b = uni(keys[1], (1, 4 * H))
    h2h_w = uni(keys[2], (hidden_size, 4 * H))
    h2h_b = uni(keys[3], (1, 4 * H))

    # column permutation [i, f, g, o] -> [i, f, o, g]
    perm = jnp.concatenate([jnp.arange(0, 2 * H),
                            jnp.arange(3 * H, 4 * H),
                            jnp.arange(2 * H, 3 * H)])

    params = {
        # original layout (reference)
        "x2h_w": x2h_w, "x2h_b": x2h_b, "h2h_w": h2h_w, "h2h_b": h2h_b,
        # kernel layout
        "wx": x2h_w[:, perm],
        "wh": h2h_w[:, perm],
        "b": (x2h_b + h2h_b)[:, perm],
        "mog_w": [],
        "mog_b": [],
    }
    for i in range(mogrify_steps):
        kw, kb = keys[4 + 2 * i], keys[5 + 2 * i]
        if i % 2 == 0:
            # Linear(hidden -> input), stored as (hidden, input)
            params["mog_w"].append(uni(kw, (hidden_size, input_size)))
            params["mog_b"].append(uni(kb, (1, input_size)))
        else:
            # Linear(input -> hidden), stored as (input, hidden)
            params["mog_w"].append(uni(kw, (input_size, hidden_size)))
            params["mog_b"].append(uni(kb, (1, hidden_size)))
    return params


def mogrifier_lstm_cell_ref(x, h, c, params, *, mogrify_steps):
    """Pure-JAX reference, PyTorch gate order [i, f, g, o]."""
    x = x.astype(jnp.float32)
    h = h.astype(jnp.float32)
    c = c.astype(jnp.float32)
    for i in range(mogrify_steps):
        w = params["mog_w"][i].astype(jnp.float32)
        b = params["mog_b"][i].astype(jnp.float32)
        if (i + 1) % 2 == 0:
            h = 2.0 * jax.nn.sigmoid(x @ w + b) * h
        else:
            x = 2.0 * jax.nn.sigmoid(h @ w + b) * x
    gates = (x @ params["x2h_w"].astype(jnp.float32) + params["x2h_b"].astype(jnp.float32)
             + h @ params["h2h_w"].astype(jnp.float32) + params["h2h_b"].astype(jnp.float32))
    H = h.shape[1]
    i_g = jax.nn.sigmoid(gates[:, :H])
    f_g = jax.nn.sigmoid(gates[:, H:2 * H])
    g = jnp.tanh(gates[:, 2 * H:3 * H])
    o_g = jax.nn.sigmoid(gates[:, 3 * H:])
    c_new = f_g * c + i_g * g
    h_new = o_g * jnp.tanh(c_new)
    return h_new, c_new


# ---------------------------------------------------------------------------
if __name__ == "__main__":
    batch = 8
    input_size = 64
    hidden_size = 64      # packed state (B, 2H) = (8, 128): one lane-dense vreg
    mogrify_steps = 5
    seq_len = 8

    key = jax.random.PRNGKey(0)
    k_param, k_x, k_h, k_c, k_xs = jax.random.split(key, 5)

    params = init_params(k_param, input_size, hidden_size, mogrify_steps)
    x = jax.random.normal(k_x, (batch, input_size), dtype=jnp.float32)
    h0 = jax.random.normal(k_h, (batch, hidden_size), dtype=jnp.float32)
    c0 = jax.random.normal(k_c, (batch, hidden_size), dtype=jnp.float32)
    hc0 = jnp.concatenate([h0, c0], axis=1)

    # ---- single-step cell (module semantics, packed-state API) ----
    cell = jax.jit(functools.partial(mogrifier_lstm_cell,
                                     mogrify_steps=mogrify_steps))
    hc1 = cell(x, hc0, params)
    jax.block_until_ready(hc1)
    h1, c1 = hc1[:, :hidden_size], hc1[:, hidden_size:]

    h1_r, c1_r = mogrifier_lstm_cell_ref(x, h0, c0, params,
                                         mogrify_steps=mogrify_steps)
    assert jnp.allclose(h1, h1_r, atol=1e-4, rtol=1e-4), "cell h mismatch"
    assert jnp.allclose(c1, c1_r, atol=1e-4, rtol=1e-4), "cell c mismatch"

    # ---- time-fused, T-gridded sequence ----
    xs = jax.random.normal(k_xs, (seq_len, batch, input_size), dtype=jnp.float32)
    seq = jax.jit(functools.partial(mogrifier_lstm_sequence,
                                    mogrify_steps=mogrify_steps))
    hs, hc_fin = seq(xs, hc0, params)
    jax.block_until_ready((hs, hc_fin))

    h_r, c_r = h0, c0
    hs_ref = []
    for t in range(seq_len):
        h_r, c_r = mogrifier_lstm_cell_ref(xs[t], h_r, c_r, params,
                                           mogrify_steps=mogrify_steps)
        hs_ref.append(h_r)
    hs_ref = jnp.stack(hs_ref, axis=0)
    assert jnp.allclose(hs, hs_ref, atol=1e-3, rtol=1e-3), "seq hs mismatch"
    assert jnp.allclose(hc_fin[:, :hidden_size], h_r, atol=1e-3, rtol=1e-3), "seq h_fin mismatch"
    assert jnp.allclose(hc_fin[:, hidden_size:], c_r, atol=1e-3, rtol=1e-3), "seq c_fin mismatch"

    print("KERNEL_OK")
</pallas_src>

<mosaic_0001>
module attributes {stable_mosaic.version = 11 : i64} {
  func.func @kernel(%arg0: memref<8x128xf32, #tpu.memory_space<vmem>>, %arg1: memref<8x64xf32, #tpu.memory_space<vmem>>, %arg2: memref<64x256xf32, #tpu.memory_space<vmem>>, %arg3: memref<64x256xf32, #tpu.memory_space<vmem>>, %arg4: memref<1x256xf32, #tpu.memory_space<vmem>>, %arg5: memref<64x64xf32, #tpu.memory_space<vmem>>, %arg6: memref<1x64xf32, #tpu.memory_space<vmem>>, %arg7: memref<64x64xf32, #tpu.memory_space<vmem>>, %arg8: memref<1x64xf32, #tpu.memory_space<vmem>>, %arg9: memref<64x64xf32, #tpu.memory_space<vmem>>, %arg10: memref<1x64xf32, #tpu.memory_space<vmem>>, %arg11: memref<64x64xf32, #tpu.memory_space<vmem>>, %arg12: memref<1x64xf32, #tpu.memory_space<vmem>>, %arg13: memref<64x64xf32, #tpu.memory_space<vmem>>, %arg14: memref<1x64xf32, #tpu.memory_space<vmem>>, %arg15: memref<8x128xf32, #tpu.memory_space<vmem>>) attributes {dimension_semantics = [], scalar_prefetch = 0 : i64, scratch_operands = 0 : i64, tpu.core_type = #tpu.core_type<tc>} {
    %c0 = arith.constant 0 : index
    %c0_0 = arith.constant 0 : index
    %0 = vector.load %arg0[%c0, %c0_0] : memref<8x128xf32, #tpu.memory_space<vmem>>, vector<8x128xf32>
    %1 = vector.extract_strided_slice %0 {offsets = [0, 0], sizes = [8, 64], strides = [1, 1]} : vector<8x128xf32> to vector<8x64xf32>
    %2 = vector.extract_strided_slice %0 {offsets = [0, 64], sizes = [8, 64], strides = [1, 1]} : vector<8x128xf32> to vector<8x64xf32>
    %c0_1 = arith.constant 0 : index
    %c0_2 = arith.constant 0 : index
    %3 = vector.load %arg1[%c0_1, %c0_2] : memref<8x64xf32, #tpu.memory_space<vmem>>, vector<8x64xf32>
    %c0_3 = arith.constant 0 : index
    %c0_4 = arith.constant 0 : index
    %4 = vector.load %arg6[%c0_3, %c0_4] : memref<1x64xf32, #tpu.memory_space<vmem>>, vector<1x64xf32>
    %c0_5 = arith.constant 0 : index
    %c0_6 = arith.constant 0 : index
    %5 = vector.load %arg5[%c0_5, %c0_6] : memref<64x64xf32, #tpu.memory_space<vmem>>, vector<64x64xf32>
    %cst = arith.constant dense<0.000000e+00> : vector<8x64xf32>
    %6 = tpu.matmul %1, %5, %cst {dimension_numbers = #tpu.dot_dimension_numbers<[1], [0], [0], [1], [0, 0, 1, 1], [], []>} : vector<8x64xf32>, vector<64x64xf32>, vector<8x64xf32> -> vector<8x64xf32>
    %7 = vector.broadcast %4 : vector<1x64xf32> to vector<8x64xf32>
    %8 = arith.addf %6, %7 : vector<8x64xf32>
    %9 = arith.negf %8 : vector<8x64xf32>
    %10 = math.exp %9 : vector<8x64xf32>
    %cst_7 = arith.constant 1.000000e+00 : f32
    %11 = vector.broadcast %cst_7 : f32 to vector<8x64xf32>
    %12 = arith.addf %11, %10 : vector<8x64xf32>
    %13 = arith.divf %11, %12 : vector<8x64xf32>
    %cst_8 = arith.constant 2.000000e+00 : f32
    %14 = vector.broadcast %cst_8 : f32 to vector<8x64xf32>
    %15 = arith.mulf %14, %13 : vector<8x64xf32>
    %16 = arith.mulf %15, %3 : vector<8x64xf32>
    %c0_9 = arith.constant 0 : index
    %c0_10 = arith.constant 0 : index
    %17 = vector.load %arg8[%c0_9, %c0_10] : memref<1x64xf32, #tpu.memory_space<vmem>>, vector<1x64xf32>
    %c0_11 = arith.constant 0 : index
    %c0_12 = arith.constant 0 : index
    %18 = vector.load %arg7[%c0_11, %c0_12] : memref<64x64xf32, #tpu.memory_space<vmem>>, vector<64x64xf32>
    %cst_13 = arith.constant dense<0.000000e+00> : vector<8x64xf32>
    %19 = tpu.matmul %16, %18, %cst_13 {dimension_numbers = #tpu.dot_dimension_numbers<[1], [0], [0], [1], [0, 0, 1, 1], [], []>} : vector<8x64xf32>, vector<64x64xf32>, vector<8x64xf32> -> vector<8x64xf32>
    %20 = vector.broadcast %17 : vector<1x64xf32> to vector<8x64xf32>
    %21 = arith.addf %19, %20 : vector<8x64xf32>
    %22 = arith.negf %21 : vector<8x64xf32>
    %23 = math.exp %22 : vector<8x64xf32>
    %cst_14 = arith.constant 1.000000e+00 : f32
    %24 = vector.broadcast %cst_14 : f32 to vector<8x64xf32>
    %25 = arith.addf %24, %23 : vector<8x64xf32>
    %26 = arith.divf %24, %25 : vector<8x64xf32>
    %cst_15 = arith.constant 2.000000e+00 : f32
    %27 = vector.broadcast %cst_15 : f32 to vector<8x64xf32>
    %28 = arith.mulf %27, %26 : vector<8x64xf32>
    %29 = arith.mulf %28, %1 : vector<8x64xf32>
    %c0_16 = arith.constant 0 : index
    %c0_17 = arith.constant 0 : index
    %30 = vector.load %arg10[%c0_16, %c0_17] : memref<1x64xf32, #tpu.memory_space<vmem>>, vector<1x64xf32>
    %c0_18 = arith.constant 0 : index
    %c0_19 = arith.constant 0 : index
    %31 = vector.load %arg9[%c0_18, %c0_19] : memref<64x64xf32, #tpu.memory_space<vmem>>, vector<64x64xf32>
    %cst_20 = arith.constant dense<0.000000e+00> : vector<8x64xf32>
    %32 = tpu.matmul %29, %31, %cst_20 {dimension_numbers = #tpu.dot_dimension_numbers<[1], [0], [0], [1], [0, 0, 1, 1], [], []>} : vector<8x64xf32>, vector<64x64xf32>, vector<8x64xf32> -> vector<8x64xf32>
    %33 = vector.broadcast %30 : vector<1x64xf32> to vector<8x64xf32>
    %34 = arith.addf %32, %33 : vector<8x64xf32>
    %35 = arith.negf %34 : vector<8x64xf32>
    %36 = math.exp %35 : vector<8x64xf32>
    %cst_21 = arith.constant 1.000000e+00 : f32
    %37 = vector.broadcast %cst_21 : f32 to vector<8x64xf32>
    %38 = arith.addf %37, %36 : vector<8x64xf32>
    %39 = arith.divf %37, %38 : vector<8x64xf32>
    %cst_22 = arith.constant 2.000000e+00 : f32
    %40 = vector.broadcast %cst_22 : f32 to vector<8x64xf32>
    %41 = arith.mulf %40, %39 : vector<8x64xf32>
    %42 = arith.mulf %41, %16 : vector<8x64xf32>
    %c0_23 = arith.constant 0 : index
    %c0_24 = arith.constant 0 : index
    %43 = vector.load %arg12[%c0_23, %c0_24] : memref<1x64xf32, #tpu.memory_space<vmem>>, vector<1x64xf32>
    %c0_25 = arith.constant 0 : index
    %c0_26 = arith.constant 0 : index
    %44 = vector.load %arg11[%c0_25, %c0_26] : memref<64x64xf32, #tpu.memory_space<vmem>>, vector<64x64xf32>
    %cst_27 = arith.constant dense<0.000000e+00> : vector<8x64xf32>
    %45 = tpu.matmul %42, %44, %cst_27 {dimension_numbers = #tpu.dot_dimension_numbers<[1], [0], [0], [1], [0, 0, 1, 1], [], []>} : vector<8x64xf32>, vector<64x64xf32>, vector<8x64xf32> -> vector<8x64xf32>
    %46 = vector.broadcast %43 : vector<1x64xf32> to vector<8x64xf32>
    %47 = arith.addf %45, %46 : vector<8x64xf32>
    %48 = arith.negf %47 : vector<8x64xf32>
    %49 = math.exp %48 : vector<8x64xf32>
    %cst_28 = arith.constant 1.000000e+00 : f32
    %50 = vector.broadcast %cst_28 : f32 to vector<8x64xf32>
    %51 = arith.addf %50, %49 : vector<8x64xf32>
    %52 = arith.divf %50, %51 : vector<8x64xf32>
    %cst_29 = arith.constant 2.000000e+00 : f32
    %53 = vector.broadcast %cst_29 : f32 to vector<8x64xf32>
    %54 = arith.mulf %53, %52 : vector<8x64xf32>
    %55 = arith.mulf %54, %29 : vector<8x64xf32>
    %c0_30 = arith.constant 0 : index
    %c0_31 = arith.constant 0 : index
    %56 = vector.load %arg14[%c0_30, %c0_31] : memref<1x64xf32, #tpu.memory_space<vmem>>, vector<1x64xf32>
    %c0_32 = arith.constant 0 : index
    %c0_33 = arith.constant 0 : index
    %57 = vector.load %arg13[%c0_32, %c0_33] : memref<64x64xf32, #tpu.memory_space<vmem>>, vector<64x64xf32>
    %cst_34 = arith.constant dense<0.000000e+00> : vector<8x64xf32>
    %58 = tpu.matmul %55, %57, %cst_34 {dimension_numbers = #tpu.dot_dimension_numbers<[1], [0], [0], [1], [0, 0, 1, 1], [], []>} : vector<8x64xf32>, vector<64x64xf32>, vector<8x64xf32> -> vector<8x64xf32>
    %59 = vector.broadcast %56 : vector<1x64xf32> to vector<8x64xf32>
    %60 = arith.addf %58, %59 : vector<8x64xf32>
    %61 = arith.negf %60 : vector<8x64xf32>
    %62 = math.exp %61 : vector<8x64xf32>
    %cst_35 = arith.constant 1.000000e+00 : f32
    %63 = vector.broadcast %cst_35 : f32 to vector<8x64xf32>
    %64 = arith.addf %63, %62 : vector<8x64xf32>
    %65 = arith.divf %63, %64 : vector<8x64xf32>
    %cst_36 = arith.constant 2.000000e+00 : f32
    %66 = vector.broadcast %cst_36 : f32 to vector<8x64xf32>
    %67 = arith.mulf %66, %65 : vector<8x64xf32>
    %68 = arith.mulf %67, %42 : vector<8x64xf32>
    %c0_37 = arith.constant 0 : index
    %c0_38 = arith.constant 0 : index
    %69 = vector.load %arg2[%c0_37, %c0_38] : memref<64x256xf32, #tpu.memory_space<vmem>>, vector<64x256xf32>
    %cst_39 = arith.constant dense<0.000000e+00> : vector<8x256xf32>
    %70 = tpu.matmul %68, %69, %cst_39 {dimension_numbers = #tpu.dot_dimension_numbers<[1], [0], [0], [1], [0, 0, 1, 1], [], []>} : vector<8x64xf32>, vector<64x256xf32>, vector<8x256xf32> -> vector<8x256xf32>
    %c0_40 = arith.constant 0 : index
    %c0_41 = arith.constant 0 : index
    %71 = vector.load %arg3[%c0_40, %c0_41] : memref<64x256xf32, #tpu.memory_space<vmem>>, vector<64x256xf32>
    %cst_42 = arith.constant dense<0.000000e+00> : vector<8x256xf32>
    %72 = tpu.matmul %55, %71, %cst_42 {dimension_numbers = #tpu.dot_dimension_numbers<[1], [0], [0], [1], [0, 0, 1, 1], [], []>} : vector<8x64xf32>, vector<64x256xf32>, vector<8x256xf32> -> vector<8x256xf32>
    %73 = arith.addf %70, %72 : vector<8x256xf32>
    %c0_43 = arith.constant 0 : index
    %c0_44 = arith.constant 0 : index
    %74 = vector.load %arg4[%c0_43, %c0_44] : memref<1x256xf32, #tpu.memory_space<vmem>>, vector<1x256xf32>
    %75 = vector.broadcast %74 : vector<1x256xf32> to vector<8x256xf32>
    %76 = arith.addf %73, %75 : vector<8x256xf32>
    %77 = vector.extract_strided_slice %76 {offsets = [0, 0], sizes = [8, 192], strides = [1, 1]} : vector<8x256xf32> to vector<8x192xf32>
    %78 = arith.negf %77 : vector<8x192xf32>
    %79 = math.exp %78 : vector<8x192xf32>
    %cst_45 = arith.constant 1.000000e+00 : f32
    %80 = vector.broadcast %cst_45 : f32 to vector<8x192xf32>
    %81 = arith.addf %80, %79 : vector<8x192xf32>
    %82 = arith.divf %80, %81 : vector<8x192xf32>
    %83 = vector.extract_strided_slice %82 {offsets = [0, 0], sizes = [8, 64], strides = [1, 1]} : vector<8x192xf32> to vector<8x64xf32>
    %84 = vector.extract_strided_slice %82 {offsets = [0, 64], sizes = [8, 64], strides = [1, 1]} : vector<8x192xf32> to vector<8x64xf32>
    %85 = vector.extract_strided_slice %82 {offsets = [0, 128], sizes = [8, 64], strides = [1, 1]} : vector<8x192xf32> to vector<8x64xf32>
    %86 = vector.extract_strided_slice %76 {offsets = [0, 192], sizes = [8, 64], strides = [1, 1]} : vector<8x256xf32> to vector<8x64xf32>
    %87 = math.tanh %86 : vector<8x64xf32>
    %88 = arith.mulf %84, %2 : vector<8x64xf32>
    %89 = arith.mulf %83, %87 : vector<8x64xf32>
    %90 = arith.addf %88, %89 : vector<8x64xf32>
    %91 = math.tanh %90 : vector<8x64xf32>
    %92 = arith.mulf %85, %91 : vector<8x64xf32>
    %93 = tpu.concatenate %92, %90 in 1 : vector<8x64xf32>, vector<8x64xf32> -> vector<8x128xf32>
    %c0_46 = arith.constant 0 : index
    %c0_47 = arith.constant 0 : index
    %94 = vector.load %arg15[%c0_46, %c0_47] : memref<8x128xf32, #tpu.memory_space<vmem>>, vector<8x128xf32>
    tpu.vector_store %arg15[%c0_46, %c0_47], %93 {strides = array<i32>} : memref<8x128xf32, #tpu.memory_space<vmem>>, vector<8x128xf32>,
    return
  }
}

</mosaic_0001>

<llo_original>
// kernel: mogrifier_lstm_cell.1
$region0: #{mogrifier_lstm_cell.1}
  #allocation0 [shape = 'u32[]', space=smem, size = 0x4, offset = 0x4, fixed_abs, tag = 'smem constant byte address 0x4 - core index']
  #allocation1 [shape = 'u32[144,128]{1,0:T(1,128)}', space=vmem, size = 0x12000, scoped, tag = 'internal scratch']
  %s0 = inlined_call_operand.hbm [shape: f32[8,128], index: 0, kind: input, shape index: {}, may-alias: {0,15}]
  %s1 = inlined_call_operand.vmem [shape: f32[8,64], index: 1, kind: input, shape index: {}]
  %s2 = inlined_call_operand.hbm [shape: f32[64,256], index: 2, kind: input, shape index: {}]
  %s3 = inlined_call_operand.hbm [shape: f32[64,256], index: 3, kind: input, shape index: {}]
  %s4 = inlined_call_operand.vmem [shape: f32[1,256], index: 4, kind: input, shape index: {}]
  %s5 = inlined_call_operand.hbm [shape: f32[64,64], index: 5, kind: input, shape index: {}]
  %s6 = inlined_call_operand.vmem [shape: f32[1,64], index: 6, kind: input, shape index: {}]
  %s7 = inlined_call_operand.hbm [shape: f32[64,64], index: 7, kind: input, shape index: {}]
  %s8 = inlined_call_operand.vmem [shape: f32[1,64], index: 8, kind: input, shape index: {}]
  %s9 = inlined_call_operand.hbm [shape: f32[64,64], index: 9, kind: input, shape index: {}]
  %s10 = inlined_call_operand.vmem [shape: f32[1,64], index: 10, kind: input, shape index: {}]
  %s11 = inlined_call_operand.hbm [shape: f32[64,64], index: 11, kind: input, shape index: {}]
  %s12 = inlined_call_operand.vmem [shape: f32[1,64], index: 12, kind: input, shape index: {}]
  %s13 = inlined_call_operand.hbm [shape: f32[64,64], index: 13, kind: input, shape index: {}]
  %s14 = inlined_call_operand.vmem [shape: f32[1,64], index: 14, kind: input, shape index: {}]
  %s15 = inlined_call_operand.hbm [shape: f32[8,128], index: 15, kind: output, shape index: {}, may-alias: {0,15}]
  %s16 = sld [smem:[#allocation0]]
  $region102: #{mogrifier_lstm_cell.1} parent=0
    _
  %s18 = ssub.s32 1, %s16
  %s19 = scalar_select 0, %s18, %s16
  $region1: #{mogrifier_lstm_cell.1} parent=0
    #allocation2 [shape = 'u8[4096]{0}', space=vmem, size = 0x1000, scoped, tag = 'input window, operand 0, single buffered']
    #allocation3 [shape = 's32[1]{0}', space=sflag, size = 0x4, scoped, tag = 'scoped memory for mogrifier_lstm_cell.1']
    #allocation4 [shape = 's32[1]{0}', space=sflag, size = 0x4, scoped, tag = 'scoped memory for mogrifier_lstm_cell.1']
    #allocation5 [shape = 'u8[65536]{0}', space=vmem, size = 0x10000, scoped, tag = 'input window, operand 2, single buffered']
    #allocation6 [shape = 's32[1]{0}', space=sflag, size = 0x4, scoped, tag = 'scoped memory for mogrifier_lstm_cell.1']
    #allocation7 [shape = 'u8[65536]{0}', space=vmem, size = 0x10000, scoped, tag = 'input window, operand 3, single buffered']
    #allocation8 [shape = 'u8[32768]{0}', space=vmem, size = 0x8000, scoped, tag = 'input window, operand 5, single buffered']
    #allocation9 [shape = 's32[1]{0}', space=sflag, size = 0x4, scoped, tag = 'scoped memory for mogrifier_lstm_cell.1']
    #allocation10 [shape = 'u8[32768]{0}', space=vmem, size = 0x8000, scoped, tag = 'input window, operand 7, single buffered']
    #allocation11 [shape = 'u8[32768]{0}', space=vmem, size = 0x8000, scoped, tag = 'input window, operand 9, single buffered']
    #allocation12 [shape = 's32[1]{0}', space=sflag, size = 0x4, scoped, tag = 'scoped memory for mogrifier_lstm_cell.1']
    #allocation13 [shape = 'u8[32768]{0}', space=vmem, size = 0x8000, scoped, tag = 'input window, operand 11, single buffered']
    #allocation14 [shape = 'u8[32768]{0}', space=vmem, size = 0x8000, scoped, tag = 'input window, operand 13, single buffered']
    #allocation15 [shape = 's32[1]{0}', space=sflag, size = 0x4, scoped, tag = 'scoped memory for mogrifier_lstm_cell.1']
    #allocation16 [shape = 'u8[4096]{0}', space=vmem, size = 0x1000, scoped, tag = 'output window, operand 0, single buffered']
    %20 = vsyncpa [#allocation3], 0
    %21 = vsyncpa [#allocation6], 0
    %22 = vsyncpa [#allocation9], 0
    %23 = vsyncpa [#allocation12], 0
    %24 = vsyncpa [#allocation15], 0
    %25 = vsyncpa [#allocation4], 0
    // Predicated region
    $region2: #{mogrifier_lstm_cell.1} parent=1 // pred_check
      _
    $region3: #{mogrifier_lstm_cell.1} parent=1 // pred_check_branch
      %27 = sbr.rel (0) target = $region5
    $region4: #{mogrifier_lstm_cell.1} parent=1 // pred_region
      %s29 = ssub.s32 128, 128
      %30 = vsyncadd [#allocation3], %s29
      %s32 = sshll.u32 [#allocation2], 4
      %s33 = int_to_ptr.vmem [resolvable:$true] %s32
      %35 = dma.hbm_to_vmem [thread:$0]  %s0, 128, %s33, [#allocation3]
    $region5: #{mogrifier_lstm_cell.1} parent=1 // pred_fallthru
      _
    // Predicated region
    $region6: #{mogrifier_lstm_cell.1} parent=1 // pred_check
      _
    $region7: #{mogrifier_lstm_cell.1} parent=1 // pred_check_branch
      %37 = sbr.rel (0) target = $region9
    $region8: #{mogrifier_lstm_cell.1} parent=1 // pred_region
      _
    $region9: #{mogrifier_lstm_cell.1} parent=1 // pred_fallthru
      _
    // Predicated region
    $region10: #{mogrifier_lstm_cell.1} parent=1 // pred_check
      _
    $region11: #{mogrifier_lstm_cell.1} parent=1 // pred_check_branch
      %39 = sbr.rel (0) target = $region13
    $region12: #{mogrifier_lstm_cell.1} parent=1 // pred_region
      %s41 = ssub.s32 2048, 2048
      %42 = vsyncadd [#allocation6], %s41
      %s43 = sshll.u32 [#allocation5], 4
      %s44 = int_to_ptr.vmem [resolvable:$true] %s43
      %49 = dma.hbm_to_vmem [thread:$0]  %s2, 2048, %s44, [#allocation6], 256, 256, 16
    $region13: #{mogrifier_lstm_cell.1} parent=1 // pred_fallthru
      _
    // Predicated region
    $region14: #{mogrifier_lstm_cell.1} parent=1 // pred_check
      _
    $region15: #{mogrifier_lstm_cell.1} parent=1 // pred_check_branch
      %51 = sbr.rel (0) target = $region17
    $region16: #{mogrifier_lstm_cell.1} parent=1 // pred_region
      %s53 = ssub.s32 2048, 2048
      %54 = vsyncadd [#allocation6], %s53
      %s55 = sshll.u32 [#allocation7], 4
      %s56 = int_to_ptr.vmem [resolvable:$true] %s55
      %61 = dma.hbm_to_vmem [thread:$0]  %s3, 2048, %s56, [#allocation6], 256, 256, 16
    $region17: #{mogrifier_lstm_cell.1} parent=1 // pred_fallthru
      _
    // Predicated region
    $region18: #{mogrifier_lstm_cell.1} parent=1 // pred_check
      _
    $region19: #{mogrifier_lstm_cell.1} parent=1 // pred_check_branch
      %63 = sbr.rel (0) target = $region21
    $region20: #{mogrifier_lstm_cell.1} parent=1 // pred_region
      _
    $region21: #{mogrifier_lstm_cell.1} parent=1 // pred_fallthru
      _
    // Predicated region
    $region22: #{mogrifier_lstm_cell.1} parent=1 // pred_check
      _
    $region23: #{mogrifier_lstm_cell.1} parent=1 // pred_check_branch
      %65 = sbr.rel (0) target = $region25
    $region24: #{mogrifier_lstm_cell.1} parent=1 // pred_region
      %s67 = ssub.s32 1024, 1024
      %68 = vsyncadd [#allocation9], %s67
      %s69 = sshll.u32 [#allocation8], 4
      %s70 = int_to_ptr.vmem [resolvable:$true] %s69
      %75 = dma.hbm_to_vmem [thread:$0]  %s5, 1024, %s70, [#allocation9], 128, 128, 8
    $region25: #{mogrifier_lstm_cell.1} parent=1 // pred_fallthru
      _
    // Predicated region
    $region26: #{mogrifier_lstm_cell.1} parent=1 // pred_check
      _
    $region27: #{mogrifier_lstm_cell.1} parent=1 // pred_check_branch
      %77 = sbr.rel (0) target = $region29
    $region28: #{mogrifier_lstm_cell.1} parent=1 // pred_region
      _
    $region29: #{mogrifier_lstm_cell.1} parent=1 // pred_fallthru
      _
    // Predicated region
    $region30: #{mogrifier_lstm_cell.1} parent=1 // pred_check
      _
    $region31: #{mogrifier_lstm_cell.1} parent=1 // pred_check_branch
      %79 = sbr.rel (0) target = $region33
    $region32: #{mogrifier_lstm_cell.1} parent=1 // pred_region
      %s81 = ssub.s32 1024, 1024
      %82 = vsyncadd [#allocation9], %s81
      %s83 = sshll.u32 [#allocation10], 4
      %s84 = int_to_ptr.vmem [resolvable:$true] %s83
      %89 = dma.hbm_to_vmem [thread:$0]  %s7, 1024, %s84, [#allocation9], 128, 128, 8
    $region33: #{mogrifier_lstm_cell.1} parent=1 // pred_fallthru
      _
    // Predicated region
    $region34: #{mogrifier_lstm_cell.1} parent=1 // pred_check
      _
    $region35: #{mogrifier_lstm_cell.1} parent=1 // pred_check_branch
      %91 = sbr.rel (0) target = $region37
    $region36: #{mogrifier_lstm_cell.1} parent=1 // pred_region
      _
    $region37: #{mogrifier_lstm_cell.1} parent=1 // pred_fallthru
      _
    // Predicated region
    $region38: #{mogrifier_lstm_cell.1} parent=1 // pred_check
      _
    $region39: #{mogrifier_lstm_cell.1} parent=1 // pred_check_branch
      %93 = sbr.rel (0) target = $region41
    $region40: #{mogrifier_lstm_cell.1} parent=1 // pred_region
      %s95 = ssub.s32 1024, 1024
      %96 = vsyncadd [#allocation12], %s95
      %s97 = sshll.u32 [#allocation11], 4
      %s98 = int_to_ptr.vmem [resolvable:$true] %s97
      %103 = dma.hbm_to_vmem [thread:$0]  %s9, 1024, %s98, [#allocation12], 128, 128, 8
    $region41: #{mogrifier_lstm_cell.1} parent=1 // pred_fallthru
      _
    // Predicated region
    $region42: #{mogrifier_lstm_cell.1} parent=1 // pred_check
      _
    $region43: #{mogrifier_lstm_cell.1} parent=1 // pred_check_branch
      %105 = sbr.rel (0) target = $region45
    $region44: #{mogrifier_lstm_cell.1} parent=1 // pred_region
      _
    $region45: #{mogrifier_lstm_cell.1} parent=1 // pred_fallthru
      _
    // Predicated region
    $region46: #{mogrifier_lstm_cell.1} parent=1 // pred_check
      _
    $region47: #{mogrifier_lstm_cell.1} parent=1 // pred_check_branch
      %107 = sbr.rel (0) target = $region49
    $region48: #{mogrifier_lstm_cell.1} parent=1 // pred_region
      %s109 = ssub.s32 1024, 1024
      %110 = vsyncadd [#allocation12], %s109
      %s111 = sshll.u32 [#allocation13], 4
      %s112 = int_to_ptr.vmem [resolvable:$true] %s111
      %117 = dma.hbm_to_vmem [thread:$0]  %s11, 1024, %s112, [#allocation12], 128, 128, 8
    $region49: #{mogrifier_lstm_cell.1} parent=1 // pred_fallthru
      _
    // Predicated region
    $region50: #{mogrifier_lstm_cell.1} parent=1 // pred_check
      _
    $region51: #{mogrifier_lstm_cell.1} parent=1 // pred_check_branch
      %119 = sbr.rel (0) target = $region53
    $region52: #{mogrifier_lstm_cell.1} parent=1 // pred_region
      _
    $region53: #{mogrifier_lstm_cell.1} parent=1 // pred_fallthru
      _
    // Predicated region
    $region54: #{mogrifier_lstm_cell.1} parent=1 // pred_check
      _
    $region55: #{mogrifier_lstm_cell.1} parent=1 // pred_check_branch
      %121 = sbr.rel (0) target = $region57
    $region56: #{mogrifier_lstm_cell.1} parent=1 // pred_region
      %s123 = ssub.s32 1024, 1024
      %124 = vsyncadd [#allocation15], %s123
      %s125 = sshll.u32 [#allocation14], 4
      %s126 = int_to_ptr.vmem [resolvable:$true] %s125
      %131 = dma.hbm_to_vmem [thread:$0]  %s13, 1024, %s126, [#allocation15], 128, 128, 8
    $region57: #{mogrifier_lstm_cell.1} parent=1 // pred_fallthru
      _
    // Predicated region
    $region58: #{mogrifier_lstm_cell.1} parent=1 // pred_check
      _
    $region59: #{mogrifier_lstm_cell.1} parent=1 // pred_check_branch
      %133 = sbr.rel (0) target = $region61
    $region60: #{mogrifier_lstm_cell.1} parent=1 // pred_region
      _
    $region61: #{mogrifier_lstm_cell.1} parent=1 // pred_fallthru
      _
    // Predicated region
    $region62: #{mogrifier_lstm_cell.1} parent=1 // pred_check
      _
    $region63: #{mogrifier_lstm_cell.1} parent=1 // pred_check_branch
      %135 = sbr.rel (0) target = $region65
    $region64: #{mogrifier_lstm_cell.1} parent=1 // pred_region
      %136 = dma.done [#allocation3], 128
    $region65: #{mogrifier_lstm_cell.1} parent=1 // pred_fallthru
      _
    // Predicated region
    $region66: #{mogrifier_lstm_cell.1} parent=1 // pred_check
      _
    $region67: #{mogrifier_lstm_cell.1} parent=1 // pred_check_branch
      %138 = sbr.rel (0) target = $region69
    $region68: #{mogrifier_lstm_cell.1} parent=1 // pred_region
      %139 = dma.done [#allocation6], 2048
    $region69: #{mogrifier_lstm_cell.1} parent=1 // pred_fallthru
      _
    // Predicated region
    $region70: #{mogrifier_lstm_cell.1} parent=1 // pred_check
      _
    $region71: #{mogrifier_lstm_cell.1} parent=1 // pred_check_branch
      %141 = sbr.rel (0) target = $region73
    $region72: #{mogrifier_lstm_cell.1} parent=1 // pred_region
      %142 = dma.done [#allocation6], 2048
    $region73: #{mogrifier_lstm_cell.1} parent=1 // pred_fallthru
      _
    // Predicated region
    $region74: #{mogrifier_lstm_cell.1} parent=1 // pred_check
      _
    $region75: #{mogrifier_lstm_cell.1} parent=1 // pred_check_branch
      %144 = sbr.rel (0) target = $region77
    $region76: #{mogrifier_lstm_cell.1} parent=1 // pred_region
      %145 = dma.done [#allocation9], 1024
    $region77: #{mogrifier_lstm_cell.1} parent=1 // pred_fallthru
      _
    // Predicated region
    $region78: #{mogrifier_lstm_cell.1} parent=1 // pred_check
      _
    $region79: #{mogrifier_lstm_cell.1} parent=1 // pred_check_branch
      %147 = sbr.rel (0) target = $region81
    $region80: #{mogrifier_lstm_cell.1} parent=1 // pred_region
      %148 = dma.done [#allocation9], 1024
    $region81: #{mogrifier_lstm_cell.1} parent=1 // pred_fallthru
      _
    // Predicated region
    $region82: #{mogrifier_lstm_cell.1} parent=1 // pred_check
      _
    $region83: #{mogrifier_lstm_cell.1} parent=1 // pred_check_branch
      %150 = sbr.rel (0) target = $region85
    $region84: #{mogrifier_lstm_cell.1} parent=1 // pred_region
      %151 = dma.done [#allocation12], 1024
    $region85: #{mogrifier_lstm_cell.1} parent=1 // pred_fallthru
      _
    // Predicated region
    $region86: #{mogrifier_lstm_cell.1} parent=1 // pred_check
      _
    $region87: #{mogrifier_lstm_cell.1} parent=1 // pred_check_branch
      %153 = sbr.rel (0) target = $region89
    $region88: #{mogrifier_lstm_cell.1} parent=1 // pred_region
      %154 = dma.done [#allocation12], 1024
    $region89: #{mogrifier_lstm_cell.1} parent=1 // pred_fallthru
      _
    // Predicated region
    $region90: #{mogrifier_lstm_cell.1} parent=1 // pred_check
      _
    $region91: #{mogrifier_lstm_cell.1} parent=1 // pred_check_branch
      %156 = sbr.rel (0) target = $region93
    $region92: #{mogrifier_lstm_cell.1} parent=1 // pred_region
      %157 = dma.done [#allocation15], 1024
    $region93: #{mogrifier_lstm_cell.1} parent=1 // pred_fallthru
      _
    %v158 = vld [vmem:[#allocation2] sm:$0xff]
    %v159 = vld [vmem:[%s1] sm:$0xff]
    %v160 = vld [vmem:[%s6] sm:$0x1]
    %v161 = vld [vmem:[#allocation8] sm:$0xff]
    %v162 = vld [vmem:[#allocation8 + $0x8] sm:$0xff]
    %v163 = vld [vmem:[#allocation8 + $0x10] sm:$0xff]
    %v164 = vld [vmem:[#allocation8 + $0x18] sm:$0xff]
    %v165 = vld [vmem:[#allocation8 + $0x20] sm:$0xff]
    %v166 = vld [vmem:[#allocation8 + $0x28] sm:$0xff]
    %v167 = vld [vmem:[#allocation8 + $0x30] sm:$0xff]
    %v168 = vld [vmem:[#allocation8 + $0x38] sm:$0xff]
    %v170 = vlaneseq
    %v171 = vshrl.u32 %v170, 7
    %v172 = vsub.s32 0, %v171
    %v173 = vrot.slane %v160, %v172
    %vm175 = vcmask 523264
    %v177 = vsel %vm175, %v158, 0
    %179 = vmatprep.subr.mxu0 0.0
    %180 = vmatpush1.msra.mxu0 %v161
    %181 = vmatprep.subr.mxu0 0.0
    %182 = vmatpush1.msra.mxu0 %v162
    %183 = vmatprep.subr.mxu0 0.0
    %184 = vmatpush1.msra.mxu0 %v163
    %185 = vmatprep.subr.mxu0 0.0
    %186 = vmatpush1.msra.mxu0 %v164
    %187 = vmatprep.subr.mxu0 0.0
    %188 = vmatpush1.msra.mxu0 %v165
    %189 = vmatprep.subr.mxu0 0.0
    %190 = vmatpush1.msra.mxu0 %v166
    %191 = vmatprep.subr.mxu0 0.0
    %192 = vmatpush1.msra.mxu0 %v167
    %193 = vmatprep.subr.mxu0 0.0
    %194 = vmatpush1.msra.mxu0 %v168
    %195 = vmatprep.subr.mxu0 0.0
    %196 = vmatpush1.msra.mxu0 0.0
    %197 = vmatprep.subr.mxu0 0.0
    %198 = vmatpush1.msra.mxu0 0.0
    %199 = vmatprep.subr.mxu0 0.0
    %200 = vmatpush1.msra.mxu0 0.0
    %201 = vmatprep.subr.mxu0 0.0
    %202 = vmatpush1.msra.mxu0 0.0
    %203 = vmatprep.subr.mxu0 0.0
    %204 = vmatpush1.msra.mxu0 0.0
    %205 = vmatprep.subr.mxu0 0.0
    %206 = vmatpush1.msra.mxu0 0.0
    %207 = vmatprep.subr.mxu0 0.0
    %208 = vmatpush1.msra.mxu0 0.0
    %209 = vmatprep.subr.mxu0 0.0
    %210 = vmatpush1.msra.mxu0 0.0
    %211 = vmatprep.subr.mxu0 0.0
    %212 = vmatpush1.msra.mxu0 0.0
    %213 = vmatprep.subr.mxu0 0.0
    %214 = vmatpush1.msra.mxu0 0.0
    %215 = vmatprep.subr.mxu0 0.0
    %216 = vmatpush1.msra.mxu0 0.0
    %217 = vmatprep.subr.mxu0 0.0
    %218 = vmatpush1.msra.mxu0 0.0
    %219 = vmatprep.subr.mxu0 0.0
    %220 = vmatpush1.msra.mxu0 0.0
    %221 = vmatprep.subr.mxu0 0.0
    %222 = vmatpush1.msra.mxu0 0.0
    %223 = vmatprep.subr.mxu0 0.0
    %224 = vmatpush1.msra.mxu0 0.0
    %225 = vmatprep.subr.mxu0 0.0
    %226 = vmatpush1.msra.mxu0 0.0
    %227 = vmatprep.subr.mxu0 0.0
    %228 = vmatpush1.msra.mxu0 0.0
    %229 = vmatprep.subr.mxu0 0.0
    %230 = vmatpush1.msra.mxu0 0.0
    %231 = vmatprep.subr.mxu0 0.0
    %232 = vmatpush1.msra.mxu0 0.0
    %233 = vmatprep.subr.mxu0 0.0
    %234 = vmatpush1.msra.mxu0 0.0
    %235 = vmatprep.subr.mxu0 0.0
    %236 = vmatpush1.msra.mxu0 0.0
    %237 = vmatprep.subr.mxu0 0.0
    %238 = vmatpush1.msra.mxu0 0.0
    %239 = vmatprep.subr.mxu0 0.0
    %240 = vmatpush1.msra.mxu0 0.0
    %241 = vmatprep.subr.mxu0 0.0
    %242 = vmatpush1.msra.mxu0 0.0
    %243 = vmatprep.mubr.f32.mxu0 0.0
    %244 = vmatmul.mubr.f32.gmra.mrb[0].mxu0 %v177
    %v245 = vpop.f32.mrb[0].mxu0
    %v246 = vadd.f32 %v173, %v245
    %v247 = vpop.f32.mrb[0].mxu0
    %248 = vdwg.mxu0
    %v249 = vxor.u32 %v246, 2147483648
    %v250 = vmul.f32 %v249, 1.442695
    %v251 = vpow.pop %v250
    %v252 = vadd.f32 %v251, 1.0
    %v253 = vrcp.pop %v252
    %v254 = vmul.f32 1.0, %v253
    %v255 = vmul.f32 %v254, 2.0
    %v256 = vmul.f32 %v255, %v159
    %v257 = vld [vmem:[%s8] sm:$0x1]
    %v258 = vld [vmem:[#allocation10] sm:$0xff]
    %v259 = vld [vmem:[#allocation10 + $0x8] sm:$0xff]
    %v260 = vld [vmem:[#allocation10 + $0x10] sm:$0xff]
    %v261 = vld [vmem:[#allocation10 + $0x18] sm:$0xff]
    %v262 = vld [vmem:[#allocation10 + $0x20] sm:$0xff]
    %v263 = vld [vmem:[#allocation10 + $0x28] sm:$0xff]
    %v264 = vld [vmem:[#allocation10 + $0x30] sm:$0xff]
    %v265 = vld [vmem:[#allocation10 + $0x38] sm:$0xff]
    %v267 = vlaneseq
    %v268 = vshrl.u32 %v267, 7
    %v269 = vsub.s32 0, %v268
    %v270 = vrot.slane %v257, %v269
    %v273 = vsel %vm175, %v256, 0
    %275 = vmatprep.subr.mxu0 0.0
    %276 = vmatpush1.msra.mxu0 %v258
    %277 = vmatprep.subr.mxu0 0.0
    %278 = vmatpush1.msra.mxu0 %v259
    %279 = vmatprep.subr.mxu0 0.0
    %280 = vmatpush1.msra.mxu0 %v260
    %281 = vmatprep.subr.mxu0 0.0
    %282 = vmatpush1.msra.mxu0 %v261
    %283 = vmatprep.subr.mxu0 0.0
    %284 = vmatpush1.msra.mxu0 %v262
    %285 = vmatprep.subr.mxu0 0.0
    %286 = vmatpush1.msra.mxu0 %v263
    %287 = vmatprep.subr.mxu0 0.0
    %288 = vmatpush1.msra.mxu0 %v264
    %289 = vmatprep.subr.mxu0 0.0
    %290 = vmatpush1.msra.mxu0 %v265
    %291 = vmatprep.subr.mxu0 0.0
    %292 = vmatpush1.msra.mxu0 0.0
    %293 = vmatprep.subr.mxu0 0.0
    %294 = vmatpush1.msra.mxu0 0.0
    %295 = vmatprep.subr.mxu0 0.0
    %296 = vmatpush1.msra.mxu0 0.0
    %297 = vmatprep.subr.mxu0 0.0
    %298 = vmatpush1.msra.mxu0 0.0
    %299 = vmatprep.subr.mxu0 0.0
    %300 = vmatpush1.msra.mxu0 0.0
    %301 = vmatprep.subr.mxu0 0.0
    %302 = vmatpush1.msra.mxu0 0.0
    %303 = vmatprep.subr.mxu0 0.0
    %304 = vmatpush1.msra.mxu0 0.0
    %305 = vmatprep.subr.mxu0 0.0
    %306 = vmatpush1.msra.mxu0 0.0
    %307 = vmatprep.subr.mxu0 0.0
    %308 = vmatpush1.msra.mxu0 0.0
    %309 = vmatprep.subr.mxu0 0.0
    %310 = vmatpush1.msra.mxu0 0.0
    %311 = vmatprep.subr.mxu0 0.0
    %312 = vmatpush1.msra.mxu0 0.0
    %313 = vmatprep.subr.mxu0 0.0
    %314 = vmatpush1.msra.mxu0 0.0
    %315 = vmatprep.subr.mxu0 0.0
    %316 = vmatpush1.msra.mxu0 0.0
    %317 = vmatprep.subr.mxu0 0.0
    %318 = vmatpush1.msra.mxu0 0.0
    %319 = vmatprep.subr.mxu0 0.0
    %320 = vmatpush1.msra.mxu0 0.0
    %321 = vmatprep.subr.mxu0 0.0
    %322 = vmatpush1.msra.mxu0 0.0
    %323 = vmatprep.subr.mxu0 0.0
    %324 = vmatpush1.msra.mxu0 0.0
    %325 = vmatprep.subr.mxu0 0.0
    %326 = vmatpush1.msra.mxu0 0.0
    %327 = vmatprep.subr.mxu0 0.0
    %328 = vmatpush1.msra.mxu0 0.0
    %329 = vmatprep.subr.mxu0 0.0
    %330 = vmatpush1.msra.mxu0 0.0
    %331 = vmatprep.subr.mxu0 0.0
    %332 = vmatpush1.msra.mxu0 0.0
    %333 = vmatprep.subr.mxu0 0.0
    %334 = vmatpush1.msra.mxu0 0.0
    %335 = vmatprep.subr.mxu0 0.0
    %336 = vmatpush1.msra.mxu0 0.0
    %337 = vmatprep.subr.mxu0 0.0
    %338 = vmatpush1.msra.mxu0 0.0
    %339 = vmatprep.mubr.f32.mxu0 0.0
    %340 = vmatmul.mubr.f32.gmra.mrb[0].mxu0 %v273
    %v341 = vpop.f32.mrb[0].mxu0
    %v342 = vadd.f32 %v270, %v341
    %v343 = vpop.f32.mrb[0].mxu0
    %344 = vdwg.mxu0
    %v345 = vxor.u32 %v342, 2147483648
    %v346 = vmul.f32 %v345, 1.442695
    %v347 = vpow.pop %v346
    %v348 = vadd.f32 %v347, 1.0
    %v349 = vrcp.pop %v348
    %v350 = vmul.f32 1.0, %v349
    %v351 = vmul.f32 %v350, 2.0
    %v352 = vmul.f32 %v351, %v158
    %v353 = vld [vmem:[%s10] sm:$0x1]
    %v354 = vld [vmem:[#allocation11] sm:$0xff]
    %v355 = vld [vmem:[#allocation11 + $0x8] sm:$0xff]
    %v356 = vld [vmem:[#allocation11 + $0x10] sm:$0xff]
    %v357 = vld [vmem:[#allocation11 + $0x18] sm:$0xff]
    %v358 = vld [vmem:[#allocation11 + $0x20] sm:$0xff]
    %v359 = vld [vmem:[#allocation11 + $0x28] sm:$0xff]
    %v360 = vld [vmem:[#allocation11 + $0x30] sm:$0xff]
    %v361 = vld [vmem:[#allocation11 + $0x38] sm:$0xff]
    %v363 = vlaneseq
    %v364 = vshrl.u32 %v363, 7
    %v365 = vsub.s32 0, %v364
    %v366 = vrot.slane %v353, %v365
    %v369 = vsel %vm175, %v352, 0
    %371 = vmatprep.subr.mxu0 0.0
    %372 = vmatpush1.msra.mxu0 %v354
    %373 = vmatprep.subr.mxu0 0.0
    %374 = vmatpush1.msra.mxu0 %v355
    %375 = vmatprep.subr.mxu0 0.0
    %376 = vmatpush1.msra.mxu0 %v356
    %377 = vmatprep.subr.mxu0 0.0
    %378 = vmatpush1.msra.mxu0 %v357
    %379 = vmatprep.subr.mxu0 0.0
    %380 = vmatpush1.msra.mxu0 %v358
    %381 = vmatprep.subr.mxu0 0.0
    %382 = vmatpush1.msra.mxu0 %v359
    %383 = vmatprep.subr.mxu0 0.0
    %384 = vmatpush1.msra.mxu0 %v360
    %385 = vmatprep.subr.mxu0 0.0
    %386 = vmatpush1.msra.mxu0 %v361
    %387 = vmatprep.subr.mxu0 0.0
    %388 = vmatpush1.msra.mxu0 0.0
    %389 = vmatprep.subr.mxu0 0.0
    %390 = vmatpush1.msra.mxu0 0.0
    %391 = vmatprep.subr.mxu0 0.0
    %392 = vmatpush1.msra.mxu0 0.0
    %393 = vmatprep.subr.mxu0 0.0
    %394 = vmatpush1.msra.mxu0 0.0
    %395 = vmatprep.subr.mxu0 0.0
    %396 = vmatpush1.msra.mxu0 0.0
    %397 = vmatprep.subr.mxu0 0.0
    %398 = vmatpush1.msra.mxu0 0.0
    %399 = vmatprep.subr.mxu0 0.0
    %400 = vmatpush1.msra.mxu0 0.0
    %401 = vmatprep.subr.mxu0 0.0
    %402 = vmatpush1.msra.mxu0 0.0
    %403 = vmatprep.subr.mxu0 0.0
    %404 = vmatpush1.msra.mxu0 0.0
    %405 = vmatprep.subr.mxu0 0.0
    %406 = vmatpush1.msra.mxu0 0.0
    %407 = vmatprep.subr.mxu0 0.0
    %408 = vmatpush1.msra.mxu0 0.0
    %409 = vmatprep.subr.mxu0 0.0
    %410 = vmatpush1.msra.mxu0 0.0
    %411 = vmatprep.subr.mxu0 0.0
    %412 = vmatpush1.msra.mxu0 0.0
    %413 = vmatprep.subr.mxu0 0.0
    %414 = vmatpush1.msra.mxu0 0.0
    %415 = vmatprep.subr.mxu0 0.0
    %416 = vmatpush1.msra.mxu0 0.0
    %417 = vmatprep.subr.mxu0 0.0
    %418 = vmatpush1.msra.mxu0 0.0
    %419 = vmatprep.subr.mxu0 0.0
    %420 = vmatpush1.msra.mxu0 0.0
    %421 = vmatprep.subr.mxu0 0.0
    %422 = vmatpush1.msra.mxu0 0.0
    %423 = vmatprep.subr.mxu0 0.0
    %424 = vmatpush1.msra.mxu0 0.0
    %425 = vmatprep.subr.mxu0 0.0
    %426 = vmatpush1.msra.mxu0 0.0
    %427 = vmatprep.subr.mxu0 0.0
    %428 = vmatpush1.msra.mxu0 0.0
    %429 = vmatprep.subr.mxu0 0.0
    %430 = vmatpush1.msra.mxu0 0.0
    %431 = vmatprep.subr.mxu0 0.0
    %432 = vmatpush1.msra.mxu0 0.0
    %433 = vmatprep.subr.mxu0 0.0
    %434 = vmatpush1.msra.mxu0 0.0
    %435 = vmatprep.mubr.f32.mxu0 0.0
    %436 = vmatmul.mubr.f32.gmra.mrb[0].mxu0 %v369
    %v437 = vpop.f32.mrb[0].mxu0
    %v438 = vadd.f32 %v366, %v437
    %v439 = vpop.f32.mrb[0].mxu0
    %440 = vdwg.mxu0
    %v441 = vxor.u32 %v438, 2147483648
    %v442 = vmul.f32 %v441, 1.442695
    %v443 = vpow.pop %v442
    %v444 = vadd.f32 %v443, 1.0
    %v445 = vrcp.pop %v444
    %v446 = vmul.f32 1.0, %v445
    %v447 = vmul.f32 %v446, 2.0
    %v448 = vmul.f32 %v447, %v256
    %v449 = vld [vmem:[%s12] sm:$0x1]
    %v450 = vld [vmem:[#allocation13] sm:$0xff]
    %v451 = vld [vmem:[#allocation13 + $0x8] sm:$0xff]
    %v452 = vld [vmem:[#allocation13 + $0x10] sm:$0xff]
    %v453 = vld [vmem:[#allocation13 + $0x18] sm:$0xff]
    %v454 = vld [vmem:[#allocation13 + $0x20] sm:$0xff]
    %v455 = vld [vmem:[#allocation13 + $0x28] sm:$0xff]
    %v456 = vld [vmem:[#allocation13 + $0x30] sm:$0xff]
    %v457 = vld [vmem:[#allocation13 + $0x38] sm:$0xff]
    %v459 = vlaneseq
    %v460 = vshrl.u32 %v459, 7
    %v461 = vsub.s32 0, %v460
    %v462 = vrot.slane %v449, %v461
    %v465 = vsel %vm175, %v448, 0
    %467 = vmatprep.subr.mxu0 0.0
    %468 = vmatpush1.msra.mxu0 %v450
    %469 = vmatprep.subr.mxu0 0.0
    %470 = vmatpush1.msra.mxu0 %v451
    %471 = vmatprep.subr.mxu0 0.0
    %472 = vmatpush1.msra.mxu0 %v452
    %473 = vmatprep.subr.mxu0 0.0
    %474 = vmatpush1.msra.mxu0 %v453
    %475 = vmatprep.subr.mxu0 0.0
    %476 = vmatpush1.msra.mxu0 %v454
    %477 = vmatprep.subr.mxu0 0.0
    %478 = vmatpush1.msra.mxu0 %v455
    %479 = vmatprep.subr.mxu0 0.0
    %480 = vmatpush1.msra.mxu0 %v456
    %481 = vmatprep.subr.mxu0 0.0
    %482 = vmatpush1.msra.mxu0 %v457
    %483 = vmatprep.subr.mxu0 0.0
    %484 = vmatpush1.msra.mxu0 0.0
    %485 = vmatprep.subr.mxu0 0.0
    %486 = vmatpush1.msra.mxu0 0.0
    %487 = vmatprep.subr.mxu0 0.0
    %488 = vmatpush1.msra.mxu0 0.0
    %489 = vmatprep.subr.mxu0 0.0
    %490 = vmatpush1.msra.mxu0 0.0
    %491 = vmatprep.subr.mxu0 0.0
    %492 = vmatpush1.msra.mxu0 0.0
    %493 = vmatprep.subr.mxu0 0.0
    %494 = vmatpush1.msra.mxu0 0.0
    %495 = vmatprep.subr.mxu0 0.0
    %496 = vmatpush1.msra.mxu0 0.0
    %497 = vmatprep.subr.mxu0 0.0
    %498 = vmatpush1.msra.mxu0 0.0
    %499 = vmatprep.subr.mxu0 0.0
    %500 = vmatpush1.msra.mxu0 0.0
    %501 = vmatprep.subr.mxu0 0.0
    %502 = vmatpush1.msra.mxu0 0.0
    %503 = vmatprep.subr.mxu0 0.0
    %504 = vmatpush1.msra.mxu0 0.0
    %505 = vmatprep.subr.mxu0 0.0
    %506 = vmatpush1.msra.mxu0 0.0
    %507 = vmatprep.subr.mxu0 0.0
    %508 = vmatpush1.msra.mxu0 0.0
    %509 = vmatprep.subr.mxu0 0.0
    %510 = vmatpush1.msra.mxu0 0.0
    %511 = vmatprep.subr.mxu0 0.0
    %512 = vmatpush1.msra.mxu0 0.0
    %513 = vmatprep.subr.mxu0 0.0
    %514 = vmatpush1.msra.mxu0 0.0
    %515 = vmatprep.subr.mxu0 0.0
    %516 = vmatpush1.msra.mxu0 0.0
    %517 = vmatprep.subr.mxu0 0.0
    %518 = vmatpush1.msra.mxu0 0.0
    %519 = vmatprep.subr.mxu0 0.0
    %520 = vmatpush1.msra.mxu0 0.0
    %521 = vmatprep.subr.mxu0 0.0
    %522 = vmatpush1.msra.mxu0 0.0
    %523 = vmatprep.subr.mxu0 0.0
    %524 = vmatpush1.msra.mxu0 0.0
    %525 = vmatprep.subr.mxu0 0.0
    %526 = vmatpush1.msra.mxu0 0.0
    %527 = vmatprep.subr.mxu0 0.0
    %528 = vmatpush1.msra.mxu0 0.0
    %529 = vmatprep.subr.mxu0 0.0
    %530 = vmatpush1.msra.mxu0 0.0
    %531 = vmatprep.mubr.f32.mxu0 0.0
    %532 = vmatmul.mubr.f32.gmra.mrb[0].mxu0 %v465
    %v533 = vpop.f32.mrb[0].mxu0
    %v534 = vadd.f32 %v462, %v533
    %v535 = vpop.f32.mrb[0].mxu0
    %536 = vdwg.mxu0
    %v537 = vxor.u32 %v534, 2147483648
    %v538 = vmul.f32 %v537, 1.442695
    %v539 = vpow.pop %v538
    %v540 = vadd.f32 %v539, 1.0
    %v541 = vrcp.pop %v540
    %v542 = vmul.f32 1.0, %v541
    %v543 = vmul.f32 %v542, 2.0
    %v544 = vmul.f32 %v543, %v352
    %v545 = vld [vmem:[%s14] sm:$0x1]
    %v546 = vld [vmem:[#allocation14] sm:$0xff]
    %v547 = vld [vmem:[#allocation14 + $0x8] sm:$0xff]
    %v548 = vld [vmem:[#allocation14 + $0x10] sm:$0xff]
    %v549 = vld [vmem:[#allocation14 + $0x18] sm:$0xff]
    %v550 = vld [vmem:[#allocation14 + $0x20] sm:$0xff]
    %v551 = vld [vmem:[#allocation14 + $0x28] sm:$0xff]
    %v552 = vld [vmem:[#allocation14 + $0x30] sm:$0xff]
    %v553 = vld [vmem:[#allocation14 + $0x38] sm:$0xff]
    %v555 = vlaneseq
    %v556 = vshrl.u32 %v555, 7
    %v557 = vsub.s32 0, %v556
    %v558 = vrot.slane %v545, %v557
    %v561 = vsel %vm175, %v544, 0
    %563 = vmatprep.subr.mxu0 0.0
    %564 = vmatpush1.msra.mxu0 %v546
    %565 = vmatprep.subr.mxu0 0.0
    %566 = vmatpush1.msra.mxu0 %v547
    %567 = vmatprep.subr.mxu0 0.0
    %568 = vmatpush1.msra.mxu0 %v548
    %569 = vmatprep.subr.mxu0 0.0
    %570 = vmatpush1.msra.mxu0 %v549
    %571 = vmatprep.subr.mxu0 0.0
    %572 = vmatpush1.msra.mxu0 %v550
    %573 = vmatprep.subr.mxu0 0.0
    %574 = vmatpush1.msra.mxu0 %v551
    %575 = vmatprep.subr.mxu0 0.0
    %576 = vmatpush1.msra.mxu0 %v552
    %577 = vmatprep.subr.mxu0 0.0
    %578 = vmatpush1.msra.mxu0 %v553
    %579 = vmatprep.subr.mxu0 0.0
    %580 = vmatpush1.msra.mxu0 0.0
    %581 = vmatprep.subr.mxu0 0.0
    %582 = vmatpush1.msra.mxu0 0.0
    %583 = vmatprep.subr.mxu0 0.0
    %584 = vmatpush1.msra.mxu0 0.0
    %585 = vmatprep.subr.mxu0 0.0
    %586 = vmatpush1.msra.mxu0 0.0
    %587 = vmatprep.subr.mxu0 0.0
    %588 = vmatpush1.msra.mxu0 0.0
    %589 = vmatprep.subr.mxu0 0.0
    %590 = vmatpush1.msra.mxu0 0.0
    %591 = vmatprep.subr.mxu0 0.0
    %592 = vmatpush1.msra.mxu0 0.0
    %593 = vmatprep.subr.mxu0 0.0
    %594 = vmatpush1.msra.mxu0 0.0
    %595 = vmatprep.subr.mxu0 0.0
    %596 = vmatpush1.msra.mxu0 0.0
    %597 = vmatprep.subr.mxu0 0.0
    %598 = vmatpush1.msra.mxu0 0.0
    %599 = vmatprep.subr.mxu0 0.0
    %600 = vmatpush1.msra.mxu0 0.0
    %601 = vmatprep.subr.mxu0 0.0
    %602 = vmatpush1.msra.mxu0 0.0
    %603 = vmatprep.subr.mxu0 0.0
    %604 = vmatpush1.msra.mxu0 0.0
    %605 = vmatprep.subr.mxu0 0.0
    %606 = vmatpush1.msra.mxu0 0.0
    %607 = vmatprep.subr.mxu0 0.0
    %608 = vmatpush1.msra.mxu0 0.0
    %609 = vmatprep.subr.mxu0 0.0
    %610 = vmatpush1.msra.mxu0 0.0
    %611 = vmatprep.subr.mxu0 0.0
    %612 = vmatpush1.msra.mxu0 0.0
    %613 = vmatprep.subr.mxu0 0.0
    %614 = vmatpush1.msra.mxu0 0.0
    %615 = vmatprep.subr.mxu0 0.0
    %616 = vmatpush1.msra.mxu0 0.0
    %617 = vmatprep.subr.mxu0 0.0
    %618 = vmatpush1.msra.mxu0 0.0
    %619 = vmatprep.subr.mxu0 0.0
    %620 = vmatpush1.msra.mxu0 0.0
    %621 = vmatprep.subr.mxu0 0.0
    %622 = vmatpush1.msra.mxu0 0.0
    %623 = vmatprep.subr.mxu0 0.0
    %624 = vmatpush1.msra.mxu0 0.0
    %625 = vmatprep.subr.mxu0 0.0
    %626 = vmatpush1.msra.mxu0 0.0
    %627 = vmatprep.mubr.f32.mxu0 0.0
    %628 = vmatmul.mubr.f32.gmra.mrb[0].mxu0 %v561
    %v629 = vpop.f32.mrb[0].mxu0
    %v630 = vadd.f32 %v558, %v629
    %v631 = vpop.f32.mrb[0].mxu0
    %632 = vdwg.mxu0
    %v633 = vxor.u32 %v630, 2147483648
    %v634 = vmul.f32 %v633, 1.442695
    %v635 = vpow.pop %v634
    %v636 = vadd.f32 %v635, 1.0
    %v637 = vrcp.pop %v636
    %v638 = vmul.f32 1.0, %v637
    %v639 = vmul.f32 %v638, 2.0
    %v640 = vmul.f32 %v639, %v448
    %v641 = vld [vmem:[#allocation5] sm:$0xff]
    %v642 = vld [vmem:[#allocation5 + $0x8] sm:$0xff]
    %v643 = vld [vmem:[#allocation5 + $0x10] sm:$0xff]
    %v644 = vld [vmem:[#allocation5 + $0x18] sm:$0xff]
    %v645 = vld [vmem:[#allocation5 + $0x20] sm:$0xff]
    %v646 = vld [vmem:[#allocation5 + $0x28] sm:$0xff]
    %v647 = vld [vmem:[#allocation5 + $0x30] sm:$0xff]
    %v648 = vld [vmem:[#allocation5 + $0x38] sm:$0xff]
    %v649 = vld [vmem:[#allocation5 + $0x40] sm:$0xff]
    %v650 = vld [vmem:[#allocation5 + $0x48] sm:$0xff]
    %v651 = vld [vmem:[#allocation5 + $0x50] sm:$0xff]
    %v652 = vld [vmem:[#allocation5 + $0x58] sm:$0xff]
    %v653 = vld [vmem:[#allocation5 + $0x60] sm:$0xff]
    %v654 = vld [vmem:[#allocation5 + $0x68] sm:$0xff]
    %v655 = vld [vmem:[#allocation5 + $0x70] sm:$0xff]
    %v656 = vld [vmem:[#allocation5 + $0x78] sm:$0xff]
    %v657 = vld [vmem:[#allocation7] sm:$0xff]
    %v658 = vld [vmem:[#allocation7 + $0x8] sm:$0xff]
    %v659 = vld [vmem:[#allocation7 + $0x10] sm:$0xff]
    %v660 = vld [vmem:[#allocation7 + $0x18] sm:$0xff]
    %v661 = vld [vmem:[#allocation7 + $0x20] sm:$0xff]
    %v662 = vld [vmem:[#allocation7 + $0x28] sm:$0xff]
    %v663 = vld [vmem:[#allocation7 + $0x30] sm:$0xff]
    %v664 = vld [vmem:[#allocation7 + $0x38] sm:$0xff]
    %v665 = vld [vmem:[#allocation7 + $0x40] sm:$0xff]
    %v666 = vld [vmem:[#allocation7 + $0x48] sm:$0xff]
    %v667 = vld [vmem:[#allocation7 + $0x50] sm:$0xff]
    %v668 = vld [vmem:[#allocation7 + $0x58] sm:$0xff]
    %v669 = vld [vmem:[#allocation7 + $0x60] sm:$0xff]
    %v670 = vld [vmem:[#allocation7 + $0x68] sm:$0xff]
    %v671 = vld [vmem:[#allocation7 + $0x70] sm:$0xff]
    %v672 = vld [vmem:[#allocation7 + $0x78] sm:$0xff]
    %673 = vmatprep.subr.mxu0 %v658
    %674 = vmatpush1.msra.mxu0 %v657
    %675 = vmatprep.subr.mxu0 %v660
    %676 = vmatpush1.msra.mxu0 %v659
    %677 = vmatprep.subr.mxu0 %v662
    %678 = vmatpush1.msra.mxu0 %v661
    %679 = vmatprep.subr.mxu0 %v664
    %680 = vmatpush1.msra.mxu0 %v663
    %681 = vmatprep.subr.mxu0 %v666
    %682 = vmatpush1.msra.mxu0 %v665
    %683 = vmatprep.subr.mxu0 %v668
    %684 = vmatpush1.msra.mxu0 %v667
    %685 = vmatprep.subr.mxu0 %v670
    %686 = vmatpush1.msra.mxu0 %v669
    %687 = vmatprep.subr.mxu0 %v672
    %688 = vmatpush1.msra.mxu0 %v671
    %689 = vmatprep.subr.mxu0 0.0
    %690 = vmatpush1.msra.mxu0 0.0
    %691 = vmatprep.subr.mxu0 0.0
    %692 = vmatpush1.msra.mxu0 0.0
    %693 = vmatprep.subr.mxu0 0.0
    %694 = vmatpush1.msra.mxu0 0.0
    %695 = vmatprep.subr.mxu0 0.0
    %696 = vmatpush1.msra.mxu0 0.0
    %697 = vmatprep.subr.mxu0 0.0
    %698 = vmatpush1.msra.mxu0 0.0
    %699 = vmatprep.subr.mxu0 0.0
    %700 = vmatpush1.msra.mxu0 0.0
    %701 = vmatprep.subr.mxu0 0.0
    %702 = vmatpush1.msra.mxu0 0.0
    %703 = vmatprep.subr.mxu0 0.0
    %704 = vmatpush1.msra.mxu0 0.0
    %705 = vmatprep.subr.mxu0 0.0
    %706 = vmatpush1.msra.mxu0 0.0
    %707 = vmatprep.subr.mxu0 0.0
    %708 = vmatpush1.msra.mxu0 0.0
    %709 = vmatprep.subr.mxu0 0.0
    %710 = vmatpush1.msra.mxu0 0.0
    %711 = vmatprep.subr.mxu0 0.0
    %712 = vmatpush1.msra.mxu0 0.0
    %713 = vmatprep.subr.mxu0 0.0
    %714 = vmatpush1.msra.mxu0 0.0
    %715 = vmatprep.subr.mxu0 0.0
    %716 = vmatpush1.msra.mxu0 0.0
    %717 = vmatprep.subr.mxu0 0.0
    %718 = vmatpush1.msra.mxu0 0.0
    %719 = vmatprep.subr.mxu0 0.0
    %720 = vmatpush1.msra.mxu0 0.0
    %721 = vmatprep.subr.mxu0 0.0
    %722 = vmatpush1.msra.mxu0 0.0
    %723 = vmatprep.subr.mxu0 0.0
    %724 = vmatpush1.msra.mxu0 0.0
    %725 = vmatprep.subr.mxu0 0.0
    %726 = vmatpush1.msra.mxu0 0.0
    %727 = vmatprep.subr.mxu0 0.0
    %728 = vmatpush1.msra.mxu0 0.0
    %729 = vmatprep.subr.mxu0 0.0
    %730 = vmatpush1.msra.mxu0 0.0
    %731 = vmatprep.subr.mxu0 0.0
    %732 = vmatpush1.msra.mxu0 0.0
    %733 = vmatprep.subr.mxu0 0.0
    %734 = vmatpush1.msra.mxu0 0.0
    %735 = vmatprep.subr.mxu0 0.0
    %736 = vmatpush1.msra.mxu0 0.0
    %737 = vmatprep.mubr.f32.mxu0 0.0
    %738 = vmatmul.mubr.f32.gmra.mrb[0].mxu0 %v561
    %v739 = vpop.f32.mrb[0].mxu0
    %v740 = vadd.f32 0.0, %v739
    %v741 = vpop.f32.mrb[0].mxu0
    %v742 = vadd.f32 0.0, %v741
    %743 = vdwg.mxu0
    %v745 = vsel %vm175, %v640, 0
    %747 = vmatprep.subr.mxu0 %v642
    %748 = vmatpush1.msra.mxu0 %v641
    %749 = vmatprep.subr.mxu0 %v644
    %750 = vmatpush1.msra.mxu0 %v643
    %751 = vmatprep.subr.mxu0 %v646
    %752 = vmatpush1.msra.mxu0 %v645
    %753 = vmatprep.subr.mxu0 %v648
    %754 = vmatpush1.msra.mxu0 %v647
    %755 = vmatprep.subr.mxu0 %v650
    %756 = vmatpush1.msra.mxu0 %v649
    %757 = vmatprep.subr.mxu0 %v652
    %758 = vmatpush1.msra.mxu0 %v651
    %759 = vmatprep.subr.mxu0 %v654
    %760 = vmatpush1.msra.mxu0 %v653
    %761 = vmatprep.subr.mxu0 %v656
    %762 = vmatpush1.msra.mxu0 %v655
    %763 = vmatprep.subr.mxu0 0.0
    %764 = vmatpush1.msra.mxu0 0.0
    %765 = vmatprep.subr.mxu0 0.0
    %766 = vmatpush1.msra.mxu0 0.0
    %767 = vmatprep.subr.mxu0 0.0
    %768 = vmatpush1.msra.mxu0 0.0
    %769 = vmatprep.subr.mxu0 0.0
    %770 = vmatpush1.msra.mxu0 0.0
    %771 = vmatprep.subr.mxu0 0.0
    %772 = vmatpush1.msra.mxu0 0.0
    %773 = vmatprep.subr.mxu0 0.0
    %774 = vmatpush1.msra.mxu0 0.0
    %775 = vmatprep.subr.mxu0 0.0
    %776 = vmatpush1.msra.mxu0 0.0
    %777 = vmatprep.subr.mxu0 0.0
    %778 = vmatpush1.msra.mxu0 0.0
    %779 = vmatprep.subr.mxu0 0.0
    %780 = vmatpush1.msra.mxu0 0.0
    %781 = vmatprep.subr.mxu0 0.0
    %782 = vmatpush1.msra.mxu0 0.0
    %783 = vmatprep.subr.mxu0 0.0
    %784 = vmatpush1.msra.mxu0 0.0
    %785 = vmatprep.subr.mxu0 0.0
    %786 = vmatpush1.msra.mxu0 0.0
    %787 = vmatprep.subr.mxu0 0.0
    %788 = vmatpush1.msra.mxu0 0.0
    %789 = vmatprep.subr.mxu0 0.0
    %790 = vmatpush1.msra.mxu0 0.0
    %791 = vmatprep.subr.mxu0 0.0
    %792 = vmatpush1.msra.mxu0 0.0
    %793 = vmatprep.subr.mxu0 0.0
    %794 = vmatpush1.msra.mxu0 0.0
    %795 = vmatprep.subr.mxu0 0.0
    %796 = vmatpush1.msra.mxu0 0.0
    %797 = vmatprep.subr.mxu0 0.0
    %798 = vmatpush1.msra.mxu0 0.0
    %799 = vmatprep.subr.mxu0 0.0
    %800 = vmatpush1.msra.mxu0 0.0
    %801 = vmatprep.subr.mxu0 0.0
    %802 = vmatpush1.msra.mxu0 0.0
    %803 = vmatprep.subr.mxu0 0.0
    %804 = vmatpush1.msra.mxu0 0.0
    %805 = vmatprep.subr.mxu0 0.0
    %806 = vmatpush1.msra.mxu0 0.0
    %807 = vmatprep.subr.mxu0 0.0
    %808 = vmatpush1.msra.mxu0 0.0
    %809 = vmatprep.subr.mxu0 0.0
    %810 = vmatpush1.msra.mxu0 0.0
    %811 = vmatprep.mubr.f32.mxu0 0.0
    %812 = vmatmul.mubr.f32.gmra.mrb[0].mxu0 %v745
    %v813 = vpop.f32.mrb[0].mxu0
    %v814 = vadd.f32 %v740, %v813
    %v815 = vpop.f32.mrb[0].mxu0
    %v816 = vadd.f32 %v742, %v815
    %817 = vdwg.mxu0
    %v818 = vld [vmem:[%s4] sm:$0x3]
    %v820 = vlaneseq
    %v821 = vshrl.u32 %v820, 7
    %v822 = vsub.s32 0, %v821
    %v823 = vrot.slane %v818, %v822
    %v824 = vlaneseq
    %v825 = vshrl.u32 %v824, 7
    %v826 = vsub.s32 1, %v825
    %v827 = vrot.slane %v818, %v826
    %v830 = vadd.f32 %v814, %v823
    %v831 = vadd.f32 %v816, %v827
    %v832 = vxor.u32 %v830, 2147483648
    %v833 = vxor.u32 %v831, 2147483648
    %v834 = vmul.f32 %v832, 1.442695
    %v835 = vpow.pop %v834
    %v836 = vmul.f32 %v833, 1.442695
    %v837 = vpow.pop %v836
    %v838 = vadd.f32 %v835, 1.0
    %v839 = vadd.f32 %v837, 1.0
    %v840 = vrcp.pop %v838
    %v841 = vmul.f32 1.0, %v840
    %v842 = vrcp.pop %v839
    %v843 = vmul.f32 1.0, %v842
    %v844 = vtanh.pop %v831
    %v845 = vmul.f32 %v841, %v158
    %847 = vrot.lane.b32.xlu0 %v844, 64
    %v848 = vpop.permute.xlu0 %847
    %v850 = vmul.f32 %v841, %v848
    %852 = vrot.lane.b32.xlu0 %v850, 64
    %v853 = vpop.permute.xlu0 %852
    %v855 = vadd.f32 %v845, %v853
    %v856 = vtanh.pop %v855
    %858 = vrot.lane.b32.xlu0 %v856, 64
    %v859 = vpop.permute.xlu0 %858
    %v861 = vmul.f32 %v843, %v859
    %v862 = vsel %vm175, %v861, %v855
    %863 = vst [vmem:[#allocation16] sm:$0xff] %v862
    // Predicated region
    $region94: #{mogrifier_lstm_cell.1} parent=1 // pred_check
      _
    $region95: #{mogrifier_lstm_cell.1} parent=1 // pred_check_branch
      %865 = sbr.rel (0) target = $region97
    $region96: #{mogrifier_lstm_cell.1} parent=1 // pred_region
      %s867 = ssub.s32 128, 128
      %868 = vsyncadd [#allocation4], %s867
      %s870 = sshll.u32 [#allocation16], 4
      %s871 = int_to_ptr.vmem [resolvable:$true] %s870
      %873 = dma.vmem_to_hbm [thread:$0]  %s871, 128, %s15, [#allocation4]
    $region97: #{mogrifier_lstm_cell.1} parent=1 // pred_fallthru
      _
    // Predicated region
    $region98: #{mogrifier_lstm_cell.1} parent=1 // pred_check
      _
    $region99: #{mogrifier_lstm_cell.1} parent=1 // pred_check_branch
      %875 = sbr.rel (0) target = $region101
    $region100: #{mogrifier_lstm_cell.1} parent=1 // pred_region
      %876 = dma.done [#allocation4], 128
    $region101: #{mogrifier_lstm_cell.1} parent=1 // pred_fallthru
      _
    %877 = vsyncpa [#allocation3], 1
    %878 = vsyncpa [#allocation6], 1
    %879 = vsyncpa [#allocation9], 1
    %880 = vsyncpa [#allocation12], 1
    %881 = vsyncpa [#allocation15], 1
    %882 = vsyncpa [#allocation4], 1

</llo_original>
